<compile_context>
chip_gen: v5e
topology: v5e:2x2
jax: 0.10.0
libtpu: 0.0.40
codegen_flags: <defaults>
</compile_context>

<pallas_src>
import math

import jax
import jax.numpy as jnp
import numpy as np
from jax.experimental import pallas as pl
from jax.experimental.pallas import tpu as pltpu


def _make_pe_table(d_model: int, max_len: int = 5000) -> jnp.ndarray:
    """(max_len, d_model) positional-encoding buffer, matching the PyTorch
    __init__ exactly (including its non-standard div_term indexing: sin uses
    div_term[0::2], cos uses div_term[1::2])."""
    position = np.arange(0, max_len, dtype=np.float64)[:, None]          # (L, 1)
    div_term = 1.0 / 10000 ** (2 * np.arange(d_model) / d_model)          # (D,)
    pe = np.zeros((max_len, d_model), dtype=np.float64)
    pe[:, 0::2] = np.sin(position * div_term[0::2])
    pe[:, 1::2] = np.cos(position * div_term[1::2])
    # PyTorch keeps pe as (max_len, 1, d_model); we store the squeezed
    # (max_len, d_model) f32 form and add the broadcast axis in the wrapper.
    return jnp.asarray(pe, dtype=jnp.float32)


def _pe_add_kernel(x_ref, pe_ref, o_ref):
    # x_ref:  (TS, TB, D') VMEM tile (x dtype)
    # pe_ref: (TS, 1,  D') VMEM tile (f32) -- size-1 batch axis, jnp
    #         broadcasting replicates it; add in f32, cast on store.
    o_ref[...] = (x_ref[...].astype(jnp.float32) + pe_ref[...]).astype(o_ref.dtype)


def _lane_fold(B: int, D: int) -> int:
    """How many batch elements to fold into the last (lane) dim so stores are
    lane-dense.  Returns 1 when no fold is possible/needed."""
    if D >= 128:
        return 1
    g = 128 // math.gcd(D, 128)      # smallest fold making g*D a multiple of 128
    if g > 1 and B % g == 0:
        return g
    if 128 % D == 0:                  # partial (power-of-two) folds still help
        while g > 1 and B % g != 0:
            g //= 2
        return g
    return 1


def _pick_batch_tile(B: int, cap: int = 64) -> int:
    """Batch (sublane) tile: multiple of 8, divisor-aware to avoid a mostly
    empty trailing tile; masked remainder only when B has no such divisor."""
    if B <= 8:
        return B                                  # full dim: always legal
    cap = min(cap, B)
    divisors = [t for t in range(8, cap + 1, 8) if B % t == 0]
    if divisors:
        return divisors[-1]                       # e.g. B=80 -> 40
    # No multiple-of-8 divisor <= cap: use a mult-of-8 tile with a masked
    # trailing block, minimizing padded work (larger tile breaks ties).
    candidates = list(range(8, cap + 1, 8))
    return min(candidates, key=lambda t: (pl.cdiv(B, t) * t - B, -t))


def _round_up(n: int, m: int) -> int:
    return ((n + m - 1) // m) * m


def positional_encoding_forward(x: jnp.ndarray, pe_table: jnp.ndarray,
                                *, target_block_bytes: int = 4 * 1024 * 1024
                                ) -> jnp.ndarray:
    """x: (S, B, D); returns x + pe[:S] broadcast over batch (same dtype as x)."""
    S, B, D = x.shape
    itemsize = x.dtype.itemsize

    # --- lane-densify small d_model -------------------------------------
    g = _lane_fold(B, D)
    B_eff, D_eff = (B // g, D * g) if g > 1 else (B, D)
    x_work = x.reshape(S, B_eff, D_eff) if g > 1 else x

    pe_s = pe_table[:S, :]                                    # (S, D) f32
    if g > 1:
        pe_s = jnp.tile(pe_s, (1, g))                         # (S, g*D), tiny
    pe_slice = pe_s.reshape(S, 1, D_eff)

    # --- tile sizes -------------------------------------------------------
    TB = _pick_batch_tile(B_eff)
    bytes_per_row = max(1, TB * D_eff * itemsize)
    TS = int(max(1, min(S, target_block_bytes // bytes_per_row)))

    # v7x has 2 TensorCores: keep >= 4 grid steps when the tensor is large
    # enough that the extra ~0.35us/step overhead is negligible.
    total_bytes = S * B_eff * D_eff * itemsize
    if total_bytes >= 4 * target_block_bytes:
        if pl.cdiv(S, TS) * pl.cdiv(B_eff, TB) < 4:
            TS = max(1, pl.cdiv(S, 4))

    grid = (pl.cdiv(S, TS), pl.cdiv(B_eff, TB))   # S outer, B inner -> pe reused

    # --- explicit scoped-VMEM budget ---------------------------------------
    # Double-buffered x-in and out blocks plus the double-buffered pe block,
    # whose size-1 batch (sublane) axis pads to 8; lanes pad to 128.
    tb_pad = _round_up(TB, 8)
    d_pad = _round_up(D_eff, 128)
    x_block_bytes = TS * tb_pad * d_pad * itemsize
    pe_block_bytes = TS * 8 * d_pad * 4
    vmem_limit = int(1.25 * (4 * x_block_bytes + 2 * pe_block_bytes)) + (2 << 20)
    vmem_limit = max(16 << 20, min(vmem_limit, 56 << 20))

    out = pl.pallas_call(
        _pe_add_kernel,
        out_shape=jax.ShapeDtypeStruct((S, B_eff, D_eff), x.dtype),
        grid=grid,
        in_specs=[
            pl.BlockSpec((TS, TB, D_eff), lambda i, j: (i, j, 0)),
            # pe indexed only by the S grid axis: stays resident across the
            # inner batch-tile loop, so pe DMA traffic is O(S*D).
            pl.BlockSpec((TS, 1, D_eff), lambda i, j: (i, 0, 0)),
        ],
        out_specs=pl.BlockSpec((TS, TB, D_eff), lambda i, j: (i, j, 0)),
        compiler_params=pltpu.CompilerParams(
            dimension_semantics=("parallel", "parallel"),
            vmem_limit_bytes=vmem_limit,
        ),
        # In-place overwrite of x (no second HBM buffer when x is donated).
        input_output_aliases={0: 0},
    )(x_work, pe_slice)

    return out.reshape(S, B, D) if g > 1 else out


def _reference(x, pe_table):
    S = x.shape[0]
    pe = pe_table[:S, :][:, None, :]                          # (S, 1, D) f32
    return (x.astype(jnp.float32) + pe).astype(x.dtype)


if __name__ == "__main__":
    key = jax.random.PRNGKey(0)

    # 1) Small shapes consistent with the module: seq=8, batch=2, d_model=32.
    S, B, D = 8, 2, 32
    x_small = jax.random.normal(key, (S, B, D), dtype=jnp.float32)
    pe_small = _make_pe_table(d_model=D, max_len=5000)
    out_small = jax.block_until_ready(positional_encoding_forward(x_small, pe_small))
    np.testing.assert_allclose(np.asarray(out_small),
                               np.asarray(_reference(x_small, pe_small)),
                               rtol=1e-6, atol=1e-6)

    # 2) Lane-fold path: d_model=32 with foldable batch (g=4 -> 128-lane stores).
    S1, B1, D1 = 32, 16, 32
    x_fold = jax.random.normal(jax.random.fold_in(key, 1), (S1, B1, D1),
                               dtype=jnp.float32)
    out_fold = jax.block_until_ready(positional_encoding_forward(x_fold, pe_small))
    np.testing.assert_allclose(np.asarray(out_fold),
                               np.asarray(_reference(x_fold, pe_small)),
                               rtol=1e-6, atol=1e-6)

    # 3) Transformer-like shape: multiple S tiles, divisor-aware TB (80 -> 40).
    S2, B2, D2 = 256, 80, 128
    x_big = jax.random.normal(jax.random.fold_in(key, 2), (S2, B2, D2),
                              dtype=jnp.float32)
    pe_big = _make_pe_table(d_model=D2, max_len=5000)
    out_big = jax.block_until_ready(positional_encoding_forward(x_big, pe_big))
    np.testing.assert_allclose(np.asarray(out_big),
                               np.asarray(_reference(x_big, pe_big)),
                               rtol=1e-6, atol=1e-6)

    # 4) Masked-remainder batch tile (B=20 -> TB=8, trailing block of 4 masked).
    S3, B3, D3 = 32, 20, 128
    x_rem = jax.random.normal(jax.random.fold_in(key, 3), (S3, B3, D3),
                              dtype=jnp.float32)
    out_rem = jax.block_until_ready(positional_encoding_forward(x_rem, pe_big))
    np.testing.assert_allclose(np.asarray(out_rem),
                               np.asarray(_reference(x_rem, pe_big)),
                               rtol=1e-6, atol=1e-6)

    print("KERNEL_OK")
</pallas_src>

<mosaic_0001>
module attributes {stable_mosaic.version = 11 : i64} {
  func.func @_pe_add_kernel(%arg0: i32, %arg1: i32, %arg2: memref<8x1x64xf32, #tpu.memory_space<vmem>>, %arg3: memref<8x1x64xf32, #tpu.memory_space<vmem>>, %arg4: memref<8x1x64xf32, #tpu.memory_space<vmem>>) attributes {dimension_semantics = [#tpu.dimension_semantics<parallel>, #tpu.dimension_semantics<parallel>], iteration_bounds = array<i64: 1, 1>, scalar_prefetch = 0 : i64, scratch_operands = 0 : i64, tpu.core_type = #tpu.core_type<tc>, window_params = [{transform_indices = @transform_0, window_bounds = array<i64: 8, 1, 64>}, {transform_indices = @transform_1, window_bounds = array<i64: 8, 1, 64>}, {transform_indices = @transform_2, window_bounds = array<i64: 8, 1, 64>}]} {
    %c0 = arith.constant 0 : index
    %c0_0 = arith.constant 0 : index
    %c0_1 = arith.constant 0 : index
    %0 = vector.load %arg2[%c0, %c0_0, %c0_1] : memref<8x1x64xf32, #tpu.memory_space<vmem>>, vector<8x1x64xf32>
    %c0_2 = arith.constant 0 : index
    %c0_3 = arith.constant 0 : index
    %c0_4 = arith.constant 0 : index
    %1 = vector.load %arg3[%c0_2, %c0_3, %c0_4] : memref<8x1x64xf32, #tpu.memory_space<vmem>>, vector<8x1x64xf32>
    %2 = arith.addf %0, %1 : vector<8x1x64xf32>
    %c0_5 = arith.constant 0 : index
    %c0_6 = arith.constant 0 : index
    %c0_7 = arith.constant 0 : index
    %3 = vector.load %arg4[%c0_5, %c0_6, %c0_7] : memref<8x1x64xf32, #tpu.memory_space<vmem>>, vector<8x1x64xf32>
    tpu.vector_store %arg4[%c0_5, %c0_6, %c0_7], %2 {strides = array<i32>} : memref<8x1x64xf32, #tpu.memory_space<vmem>>, vector<8x1x64xf32>,
    return
  }
  func.func @transform_0(%arg0: i32, %arg1: i32) -> (i32, i32, i32) {
    %c0_i32 = arith.constant 0 : i32
    %c0_i32_0 = arith.constant 0 : i32
    return %arg0, %arg1, %c0_i32 : i32, i32, i32
  }
  func.func @transform_1(%arg0: i32, %arg1: i32) -> (i32, i32, i32) {
    %c0_i32 = arith.constant 0 : i32
    %c0_i32_0 = arith.constant 0 : i32
    %c0_i32_1 = arith.constant 0 : i32
    return %arg0, %c0_i32, %c0_i32_0 : i32, i32, i32
  }
  func.func @transform_2(%arg0: i32, %arg1: i32) -> (i32, i32, i32) {
    %c0_i32 = arith.constant 0 : i32
    %c0_i32_0 = arith.constant 0 : i32
    return %arg0, %arg1, %c0_i32 : i32, i32, i32
  }
}

</mosaic_0001>

<llo_original>
// kernel: tpu_custom_call.1
$region0: #{tpu_custom_call.1}
  #allocation0 [shape = 'u32[]', space=smem, size = 0x4, offset = 0x4, fixed_abs, tag = 'smem constant byte address 0x4 - core index']
  #allocation1 [shape = 'u32[72,128]{1,0:T(1,128)}', space=vmem, size = 0x9000, scoped, tag = 'internal scratch']
  %s0 = inlined_call_operand.hbm [shape: f32[8,1,64], index: 0, kind: input, shape index: {}, may-alias: {0,2}]
  %s1 = inlined_call_operand.vmem [shape: f32[8,1,64], index: 1, kind: input, shape index: {}]
  %s2 = inlined_call_operand.hbm [shape: f32[8,1,64], index: 2, kind: output, shape index: {}, may-alias: {0,2}]
  %s3 = sld [smem:[#allocation0]]
  $region22: #{tpu_custom_call.1} parent=0
    _
  %s5 = ssub.s32 1, %s3
  %s6 = scalar_select 0, %s5, %s3
  $region1: #{tpu_custom_call.1} parent=0
    #allocation2 [shape = 'u8[4096]{0}', space=vmem, size = 0x1000, scoped, tag = 'input window, operand 0, single buffered']
    #allocation3 [shape = 's32[1]{0}', space=sflag, size = 0x4, scoped, tag = 'scoped memory for tpu_custom_call.1']
    #allocation4 [shape = 's32[1]{0}', space=sflag, size = 0x4, scoped, tag = 'scoped memory for tpu_custom_call.1']
    #allocation5 [shape = 'u8[4096]{0}', space=vmem, size = 0x1000, scoped, tag = 'output window, operand 0, single buffered']
    %7 = vsyncpa [#allocation3], 0
    %8 = vsyncpa [#allocation4], 0
    // Predicated region
    $region2: #{tpu_custom_call.1} parent=1 // pred_check
      _
    $region3: #{tpu_custom_call.1} parent=1 // pred_check_branch
      %10 = sbr.rel (0) target = $region5
    $region4: #{tpu_custom_call.1} parent=1 // pred_region
      %12 = vsyncadd [#allocation3], 0
      %s13 = sshll.u32 %s0, 4
      %s14 = int_to_ptr.hbm [resolvable:$true] %s13
      %s15 = sshll.u32 [#allocation2], 4
      %s16 = int_to_ptr.vmem [resolvable:$true] %s15
      %21 = dma.hbm_to_vmem [thread:$0]  %s14, 128, %s16, [#allocation3], 16, 16, 1
    $region5: #{tpu_custom_call.1} parent=1 // pred_fallthru
      _
    // Predicated region
    $region6: #{tpu_custom_call.1} parent=1 // pred_check
      _
    $region7: #{tpu_custom_call.1} parent=1 // pred_check_branch
      %23 = sbr.rel (0) target = $region9
    $region8: #{tpu_custom_call.1} parent=1 // pred_region
      _
    $region9: #{tpu_custom_call.1} parent=1 // pred_fallthru
      _
    // Predicated region
    $region10: #{tpu_custom_call.1} parent=1 // pred_check
      _
    $region11: #{tpu_custom_call.1} parent=1 // pred_check_branch
      %25 = sbr.rel (0) target = $region13
    $region12: #{tpu_custom_call.1} parent=1 // pred_region
      %27 = dma.done [#allocation3], 128
    $region13: #{tpu_custom_call.1} parent=1 // pred_fallthru
      _
    %v28 = vld [vmem:[#allocation2] sm:$0x1]
    %v29 = vld [vmem:[#allocation2 + $0x1] sm:$0x1]
    %v30 = vld [vmem:[#allocation2 + $0x2] sm:$0x1]
    %v31 = vld [vmem:[#allocation2 + $0x3] sm:$0x1]
    %v32 = vld [vmem:[#allocation2 + $0x4] sm:$0x1]
    %v33 = vld [vmem:[#allocation2 + $0x5] sm:$0x1]
    %v34 = vld [vmem:[#allocation2 + $0x6] sm:$0x1]
    %v35 = vld [vmem:[#allocation2 + $0x7] sm:$0x1]
    %v36 = vld [vmem:[%s1] sm:$0x1]
    %v37 = vld [vmem:[%s1 + $0x1] sm:$0x1]
    %v38 = vld [vmem:[%s1 + $0x2] sm:$0x1]
    %v39 = vld [vmem:[%s1 + $0x3] sm:$0x1]
    %v40 = vld [vmem:[%s1 + $0x4] sm:$0x1]
    %v41 = vld [vmem:[%s1 + $0x5] sm:$0x1]
    %v42 = vld [vmem:[%s1 + $0x6] sm:$0x1]
    %v43 = vld [vmem:[%s1 + $0x7] sm:$0x1]
    %v44 = vadd.f32 %v28, %v36
    %v45 = vadd.f32 %v29, %v37
    %v46 = vadd.f32 %v30, %v38
    %v47 = vadd.f32 %v31, %v39
    %v48 = vadd.f32 %v32, %v40
    %v49 = vadd.f32 %v33, %v41
    %v50 = vadd.f32 %v34, %v42
    %v51 = vadd.f32 %v35, %v43
    %vm52 = vcmask 516096
    %53 = vst.msk [vmem:[#allocation5] sm:$0x1] %vm52, %v44
    %54 = vst.msk [vmem:[#allocation5 + $0x1] sm:$0x1] %vm52, %v45
    %55 = vst.msk [vmem:[#allocation5 + $0x2] sm:$0x1] %vm52, %v46
    %56 = vst.msk [vmem:[#allocation5 + $0x3] sm:$0x1] %vm52, %v47
    %57 = vst.msk [vmem:[#allocation5 + $0x4] sm:$0x1] %vm52, %v48
    %58 = vst.msk [vmem:[#allocation5 + $0x5] sm:$0x1] %vm52, %v49
    %59 = vst.msk [vmem:[#allocation5 + $0x6] sm:$0x1] %vm52, %v50
    %60 = vst.msk [vmem:[#allocation5 + $0x7] sm:$0x1] %vm52, %v51
    // Predicated region
    $region14: #{tpu_custom_call.1} parent=1 // pred_check
      _
    $region15: #{tpu_custom_call.1} parent=1 // pred_check_branch
      %62 = sbr.rel (0) target = $region17
    $region16: #{tpu_custom_call.1} parent=1 // pred_region
      %64 = vsyncadd [#allocation4], 0
      %s65 = sshll.u32 [#allocation5], 4
      %s66 = int_to_ptr.vmem [resolvable:$true] %s65
      %s67 = sshll.u32 %s2, 4
      %s68 = int_to_ptr.hbm [resolvable:$true] %s67
      %73 = dma.vmem_to_hbm [thread:$0]  %s66, 128, %s68, [#allocation4], 16, 16, 1
    $region17: #{tpu_custom_call.1} parent=1 // pred_fallthru
      _
    // Predicated region
    $region18: #{tpu_custom_call.1} parent=1 // pred_check
      _
    $region19: #{tpu_custom_call.1} parent=1 // pred_check_branch
      %75 = sbr.rel (0) target = $region21
    $region20: #{tpu_custom_call.1} parent=1 // pred_region
      %77 = dma.done [#allocation4], 128
    $region21: #{tpu_custom_call.1} parent=1 // pred_fallthru
      _
    %78 = vsyncpa [#allocation3], 1
    %79 = vsyncpa [#allocation4], 1

</llo_original>
